<compile_context>
chip_gen: v5e
topology: v5e:2x2
jax: 0.10.0
libtpu: 0.0.40
codegen_flags: <defaults>
</compile_context>

<pallas_src>
import jax
import jax.numpy as jnp
from jax.experimental import pallas as pl
from jax.experimental.pallas import tpu as pltpu


def _round_up(x: int, m: int) -> int:
    return (x + m - 1) // m * m


def _round_down(x: int, m: int) -> int:
    return max(m, x // m * m)


# --------------------------------------------------------------------------
# Kernels
# --------------------------------------------------------------------------
def _linear_folded_kernel(x_ref, w_ref, b_ref, o_ref, acc_ref):
    """y = x @ W' + b'   (projector already folded into W', b')."""
    k = pl.program_id(2)

    @pl.when(k == 0)
    def _init():
        # Seed the accumulator with the (f32) bias: saves a full VPU pass
        # over the (TR, TN) tile in the finalize step.
        acc_ref[...] = jnp.broadcast_to(b_ref[...], acc_ref.shape)

    acc_ref[...] += jnp.dot(x_ref[...], w_ref[...],
                            preferred_element_type=jnp.float32)

    @pl.when(k == pl.num_programs(2) - 1)
    def _finalize():
        o_ref[...] = acc_ref[...].astype(o_ref.dtype)


def _linear_project_kernel(x_ref, w_ref, b_ref, dirs_ref, dirs_t_ref,
                           o_ref, acc_ref):
    """y = x @ W + b ; y -= (y @ dirs^T) @ dirs  (dirs^T precomputed on host)."""
    k = pl.program_id(2)

    @pl.when(k == 0)
    def _init():
        acc_ref[...] = jnp.broadcast_to(b_ref[...], acc_ref.shape)

    acc_ref[...] += jnp.dot(x_ref[...], w_ref[...],
                            preferred_element_type=jnp.float32)

    @pl.when(k == pl.num_programs(2) - 1)
    def _finalize():
        y = acc_ref[...]                                                  # (TR, Ho)
        coeff = jnp.dot(y, dirs_t_ref[...],
                        preferred_element_type=jnp.float32)              # (TR, Mp)
        proj = jnp.dot(coeff, dirs_ref[...],
                       preferred_element_type=jnp.float32)               # (TR, Ho)
        o_ref[...] = (y - proj).astype(o_ref.dtype)


# --------------------------------------------------------------------------
# One-time parameter preparation (fold + pad + cast, hoisted out of forward)
# --------------------------------------------------------------------------
def _vmem_budget_bytes() -> int:
    """Physical per-core VMEM with ~12.5% headroom (56 MiB v7x, 112 MiB v5e/v6e)."""
    try:
        phys = int(pltpu.get_tpu_info().vmem_capacity_bytes)
    except Exception:
        phys = 64 << 20                       # conservative: v7x 64 MiB / TC
    return (phys * 7) // 8


def prepare_projection_linear(w, b, dirs, *, fold=True,
                              compute_dtype=jnp.bfloat16,
                              row_tile=512, k_tile=512, n_tile=2048):
    """Fold / pad / cast the Linear params once.

    w: [H_in, H_out] (pre-transposed), b: [H_out], dirs: [M, H_out] orthonormal rows.
    """
    H_in, H_out = w.shape
    M = dirs.shape[0]
    compute_dtype = jnp.dtype(compute_dtype)
    itm = compute_dtype.itemsize
    align = max(8, 32 // itm)                 # sublane pack: 8 f32 / 16 bf16 / 32 int8
    budget = _vmem_budget_bytes()

    # ---- tile selection (batch-independent; TR is an upper bound) ----------
    TR = _round_up(row_tile, align)
    TK = min(_round_down(k_tile, 128), _round_up(H_in, 128))
    if fold:
        TN = min(_round_down(n_tile, 128), _round_up(H_out, 128))
    else:
        TN = _round_up(H_out, 128)            # in-kernel projection mixes all H_out
    M_p = _round_up(M, 128)                   # lane-dense coeff in finalize
    extra = 0 if fold else 4 * M_p * TN * 4   # dirs + dirs^T, double-buffered, f32

    def _vmem(tr, tk, tn):
        # double buffers for x / w / bias / out (out itemsize <= 4) + f32 acc.
        return (2 * (tr * tk * itm + tk * tn * itm + tn * 4 + tr * tn * 4)
                + tr * tn * 4 + extra)

    # Shrink tiles (N first, then K, then rows) until we fit the VMEM budget.
    for _ in range(64):
        if _vmem(TR, TK, TN) <= budget:
            break
        if fold and TN > 128:
            TN = _round_down(TN // 2, 128)
        elif TK > 128:
            TK = _round_down(TK // 2, 128)
        elif TR > align:
            TR = _round_down(TR // 2, align)
        else:
            break

    # Pad K / N up to multiples of the tiles (zero padding is numerically free):
    # we NEVER fall back to a full-H_in weight block.
    H_in_p = _round_up(H_in, TK)
    H_out_p = _round_up(H_out, TN)

    # ---- fold the (linear) projector into the Linear params ----------------
    if fold:
        w_eff = w - (w @ dirs.T) @ dirs
        b_eff = b - (b @ dirs.T) @ dirs
    else:
        w_eff, b_eff = w, b

    # ---- pad / cast once ----------------------------------------------------
    w_p = w_eff if w_eff.dtype == compute_dtype else w_eff.astype(compute_dtype)
    if (H_in_p, H_out_p) != (H_in, H_out):
        w_p = jnp.pad(w_p, ((0, H_in_p - H_in), (0, H_out_p - H_out)))
    b_p = b_eff.astype(jnp.float32)
    if H_out_p != H_out:
        b_p = jnp.pad(b_p, (0, H_out_p - H_out))
    b_p = b_p.reshape(1, H_out_p)

    dirs_p = dirs_t = None
    if not fold:
        dirs_p = jnp.pad(dirs.astype(jnp.float32),
                         ((0, M_p - M), (0, H_out_p - H_out)))
        dirs_t = dirs_p.T                                     # (H_out_p, M_p)

    return dict(w_p=w_p, b_p=b_p, dirs_p=dirs_p, dirs_t=dirs_t,
                fold=fold, compute_dtype=compute_dtype, align=align,
                TR_max=TR, TK=TK, TN=TN, M_p=M_p,
                H_in=H_in, H_out=H_out, H_in_p=H_in_p, H_out_p=H_out_p,
                vmem_budget=budget)


# --------------------------------------------------------------------------
# Forward
# --------------------------------------------------------------------------
def projection_linear_apply(x, params):
    """x: [B, N, H_in] -> [B, N, H_out], using prepared (folded/padded) params."""
    p = params
    B, N, H_in = x.shape
    assert H_in == p["H_in"], "hidden size mismatch"
    rows = B * N
    out_dtype = x.dtype
    cdt = p["compute_dtype"]
    align, TK, TN = p["align"], p["TK"], p["TN"]
    H_in_p, H_out_p, H_out = p["H_in_p"], p["H_out_p"], p["H_out"]

    # Row tile: biggest multiple of the sublane pack <= TR_max that covers rows.
    # (On v7x, rows_p//TR >= 2 keeps both TensorCores busy; TR_max trades that
    #  against weight re-streaming, which dominates for the 1-TC v5e/v6e.)
    TR = min(p["TR_max"], _round_up(rows, align))
    rows_p = _round_up(rows, TR)

    # ---- host-side plumbing, skipped when already aligned -------------------
    x2d = x.reshape(rows, H_in)
    if x2d.dtype != cdt:
        x2d = x2d.astype(cdt)
    if (rows_p, H_in_p) != (rows, H_in):
        x2d = jnp.pad(x2d, ((0, rows_p - rows), (0, H_in_p - H_in)))

    grid = (rows_p // TR, H_out_p // TN, H_in_p // TK)   # K last (reduction)

    in_specs = [
        pl.BlockSpec((TR, TK), lambda i, j, k: (i, k)),    # x tile
        pl.BlockSpec((TK, TN), lambda i, j, k: (k, j)),    # weight slab (streams k)
        pl.BlockSpec((1, TN), lambda i, j, k: (0, j)),     # bias
    ]
    operands = [x2d, p["w_p"], p["b_p"]]
    kernel = _linear_folded_kernel
    extra_bytes = 0
    if not p["fold"]:
        in_specs += [
            pl.BlockSpec((p["M_p"], H_out_p), lambda i, j, k: (0, 0)),
            pl.BlockSpec((H_out_p, p["M_p"]), lambda i, j, k: (0, 0)),
        ]
        operands += [p["dirs_p"], p["dirs_t"]]
        kernel = _linear_project_kernel
        extra_bytes = 2 * p["M_p"] * H_out_p * 4

    # ---- VMEM limit (never above the per-generation physical budget) --------
    itm = jnp.dtype(cdt).itemsize
    out_itm = jnp.dtype(out_dtype).itemsize
    blk = (2 * (TR * TK * itm + TK * TN * itm + TN * 4 + TR * TN * out_itm)
           + TR * TN * 4 + 2 * extra_bytes)
    vmem_limit = int(min(max(blk + (4 << 20), 32 << 20), p["vmem_budget"]))

    # ---- honest cost estimate ------------------------------------------------
    flops = 2 * rows_p * H_in_p * H_out_p
    if not p["fold"]:
        flops += 4 * rows_p * H_out_p * p["M_p"]
    bytes_accessed = (x2d.size * itm * (H_out_p // TN)          # x re-read per N tile
                      + p["w_p"].size * itm * (rows_p // TR)    # W re-streamed per row tile
                      + rows_p * H_out_p * out_itm
                      + p["b_p"].size * 4 + extra_bytes)
    cost = pl.CostEstimate(flops=flops, transcendentals=0,
                           bytes_accessed=bytes_accessed)

    out2d = pl.pallas_call(
        kernel,
        out_shape=jax.ShapeDtypeStruct((rows_p, H_out_p), out_dtype),
        grid_spec=pltpu.PrefetchScalarGridSpec(
            num_scalar_prefetch=0,
            grid=grid,
            in_specs=in_specs,
            out_specs=pl.BlockSpec((TR, TN), lambda i, j, k: (i, j)),
            scratch_shapes=[pltpu.VMEM((TR, TN), jnp.float32)],
        ),
        compiler_params=pltpu.CompilerParams(
            # rows / H_out: parallel (megacore on v7x); K: reduction -> arbitrary, last.
            dimension_semantics=("parallel", "parallel", "arbitrary"),
            vmem_limit_bytes=vmem_limit,
        ),
        cost_estimate=cost,
    )(*operands)

    if (rows_p, H_out_p) != (rows, H_out):
        out2d = out2d[:rows, :H_out]
    return out2d.reshape(B, N, H_out)


def projection_wrapper_forward(x, w, b, dirs, **opts):
    """Convenience one-shot path (prepare + apply). For repeated calls, call
    prepare_projection_linear once and reuse the params."""
    return projection_linear_apply(x, prepare_projection_linear(w, b, dirs, **opts))


# --------------------------------------------------------------------------
# Reference + self-test
# --------------------------------------------------------------------------
def _reference_forward(x, w, b, dirs):
    y = jnp.einsum("bnh,hk->bnk", x, w) + b
    y = y - jnp.einsum("bnh,mh,mk->bnk", y, dirs, dirs)
    return y


if __name__ == "__main__":
    key = jax.random.PRNGKey(0)
    B, N, H = 2, 8, 32
    M = 4  # number of orthonormal directions

    k_x, k_w, k_b, k_d = jax.random.split(key, 4)

    x = jax.random.normal(k_x, (B, N, H), dtype=jnp.float32)

    # wrapped_module = Linear(H, H); weight stored pre-transposed [H_in, H_out]
    w = jax.random.normal(k_w, (H, H), dtype=jnp.float32) * 0.05
    b = jax.random.normal(k_b, (H,), dtype=jnp.float32) * 0.01

    # orthonormal dirs [M, H] via QR (matches the module's orthonormality check)
    raw = jax.random.normal(k_d, (H, M), dtype=jnp.float32)
    q, _ = jnp.linalg.qr(raw)            # (H, M), orthonormal columns
    dirs = q.T                           # (M, H), orthonormal rows
    assert jnp.allclose(dirs @ dirs.T, jnp.eye(M), atol=1e-5), \
        "Directions should be orthonormal"

    ref = _reference_forward(x, w, b, dirs)

    # 1) default path: projector folded, bf16 MXU operands, f32 accumulation,
    #    params prepared ONCE and reused across calls.
    params = prepare_projection_linear(w, b, dirs)            # fold=True, bf16
    out_bf16 = jax.block_until_ready(projection_linear_apply(x, params))
    assert out_bf16.shape == (B, N, H)
    assert jnp.allclose(out_bf16, ref, atol=3e-2, rtol=3e-2), "default bf16 path mismatch"
    out_bf16_again = jax.block_until_ready(projection_linear_apply(x, params))
    assert jnp.allclose(out_bf16_again, out_bf16), "prepared-params reuse mismatch"

    # 2) f32 operands (tight tolerance)
    out_f32 = jax.block_until_ready(
        projection_wrapper_forward(x, w, b, dirs, compute_dtype=jnp.float32))
    assert jnp.allclose(out_f32, ref, atol=1e-4, rtol=1e-4), "f32 folded path mismatch"

    # 3) unfolded path: in-kernel projection with lane-padded, pre-transposed dirs
    out_proj = jax.block_until_ready(
        projection_wrapper_forward(x, w, b, dirs, fold=False,
                                   compute_dtype=jnp.float32))
    assert jnp.allclose(out_proj, ref, atol=1e-4, rtol=1e-4), "in-kernel projection mismatch"

    print("KERNEL_OK")
</pallas_src>

<mosaic_0001>
module attributes {stable_mosaic.version = 11 : i64} {
  func.func @_linear_folded_kernel(%arg0: i32, %arg1: i32, %arg2: i32, %arg3: memref<16x128xbf16, #tpu.memory_space<vmem>>, %arg4: memref<128x128xbf16, #tpu.memory_space<vmem>>, %arg5: memref<1x128xf32, #tpu.memory_space<vmem>>, %arg6: memref<16x128xf32, #tpu.memory_space<vmem>>, %arg7: memref<16x128xf32, #tpu.memory_space<vmem>>) attributes {dimension_semantics = [#tpu.dimension_semantics<parallel>, #tpu.dimension_semantics<parallel>, #tpu.dimension_semantics<arbitrary>], iteration_bounds = array<i64: 1, 1, 1>, scalar_prefetch = 0 : i64, scratch_operands = 1 : i64, tpu.core_type = #tpu.core_type<tc>, window_params = [{transform_indices = @transform_0, window_bounds = array<i64: 16, 128>}, {transform_indices = @transform_1, window_bounds = array<i64: 128, 128>}, {transform_indices = @transform_2, window_bounds = array<i64: 1, 128>}, {transform_indices = @transform_3, window_bounds = array<i64: 16, 128>}]} {
    %c0_i32 = arith.constant 0 : i32
    %0 = arith.cmpi eq, %arg2, %c0_i32 : i32
    %1 = arith.extui %0 : i1 to i32
    %c0_i32_0 = arith.constant 0 : i32
    %2 = arith.cmpi ne, %1, %c0_i32_0 : i32
    scf.if %2 {
      %c0_10 = arith.constant 0 : index
      %c0_11 = arith.constant 0 : index
      %12 = vector.load %arg5[%c0_10, %c0_11] : memref<1x128xf32, #tpu.memory_space<vmem>>, vector<1x128xf32>
      %13 = vector.shape_cast %12 : vector<1x128xf32> to vector<1x128xf32>
      %14 = vector.broadcast %13 : vector<1x128xf32> to vector<16x128xf32>
      %c0_12 = arith.constant 0 : index
      %c0_13 = arith.constant 0 : index
      %15 = vector.load %arg7[%c0_12, %c0_13] : memref<16x128xf32, #tpu.memory_space<vmem>>, vector<16x128xf32>
      tpu.vector_store %arg7[%c0_12, %c0_13], %14 {strides = array<i32>} : memref<16x128xf32, #tpu.memory_space<vmem>>, vector<16x128xf32>,
    } else {
    }
    %c0 = arith.constant 0 : index
    %c0_1 = arith.constant 0 : index
    %3 = vector.load %arg7[%c0, %c0_1] : memref<16x128xf32, #tpu.memory_space<vmem>>, vector<16x128xf32>
    %c0_2 = arith.constant 0 : index
    %c0_3 = arith.constant 0 : index
    %4 = vector.load %arg3[%c0_2, %c0_3] : memref<16x128xbf16, #tpu.memory_space<vmem>>, vector<16x128xbf16>
    %c0_4 = arith.constant 0 : index
    %c0_5 = arith.constant 0 : index
    %5 = vector.load %arg4[%c0_4, %c0_5] : memref<128x128xbf16, #tpu.memory_space<vmem>>, vector<128x128xbf16>
    %cst = arith.constant dense<0.000000e+00> : vector<16x128xf32>
    %6 = tpu.matmul %4, %5, %cst {dimension_numbers = #tpu.dot_dimension_numbers<[1], [0], [0], [1], [0, 0, 1, 1], [], []>} : vector<16x128xbf16>, vector<128x128xbf16>, vector<16x128xf32> -> vector<16x128xf32>
    %7 = arith.addf %3, %6 : vector<16x128xf32>
    %c0_6 = arith.constant 0 : index
    %c0_7 = arith.constant 0 : index
    %8 = vector.load %arg7[%c0_6, %c0_7] : memref<16x128xf32, #tpu.memory_space<vmem>>, vector<16x128xf32>
    tpu.vector_store %arg7[%c0_6, %c0_7], %7 {strides = array<i32>} : memref<16x128xf32, #tpu.memory_space<vmem>>, vector<16x128xf32>,
    %c0_i32_8 = arith.constant 0 : i32
    %9 = arith.cmpi eq, %arg2, %c0_i32_8 : i32
    %10 = arith.extui %9 : i1 to i32
    %c0_i32_9 = arith.constant 0 : i32
    %11 = arith.cmpi ne, %10, %c0_i32_9 : i32
    scf.if %11 {
      %c0_10 = arith.constant 0 : index
      %c0_11 = arith.constant 0 : index
      %12 = vector.load %arg7[%c0_10, %c0_11] : memref<16x128xf32, #tpu.memory_space<vmem>>, vector<16x128xf32>
      %c0_12 = arith.constant 0 : index
      %c0_13 = arith.constant 0 : index
      %13 = vector.load %arg6[%c0_12, %c0_13] : memref<16x128xf32, #tpu.memory_space<vmem>>, vector<16x128xf32>
      tpu.vector_store %arg6[%c0_12, %c0_13], %12 {strides = array<i32>} : memref<16x128xf32, #tpu.memory_space<vmem>>, vector<16x128xf32>,
    } else {
    }
    return
  }
  func.func @transform_0(%arg0: i32, %arg1: i32, %arg2: i32) -> (i32, i32) {
    %c0_i32 = arith.constant 0 : i32
    return %arg0, %arg2 : i32, i32
  }
  func.func @transform_1(%arg0: i32, %arg1: i32, %arg2: i32) -> (i32, i32) {
    %c0_i32 = arith.constant 0 : i32
    return %arg2, %arg1 : i32, i32
  }
  func.func @transform_2(%arg0: i32, %arg1: i32, %arg2: i32) -> (i32, i32) {
    %c0_i32 = arith.constant 0 : i32
    %c0_i32_0 = arith.constant 0 : i32
    return %c0_i32, %arg1 : i32, i32
  }
  func.func @transform_3(%arg0: i32, %arg1: i32, %arg2: i32) -> (i32, i32) {
    %c0_i32 = arith.constant 0 : i32
    return %arg0, %arg1 : i32, i32
  }
}

</mosaic_0001>

<llo_original>
// kernel: tpu_custom_call.1
$region0: #{tpu_custom_call.1}
  #allocation0 [shape = 'u32[]', space=smem, size = 0x4, offset = 0x4, fixed_abs, tag = 'smem constant byte address 0x4 - core index']
  #allocation1 [shape = 'u32[72,128]{1,0:T(1,128)}', space=vmem, size = 0x9000, scoped, tag = 'internal scratch']
  #allocation2 [shape = 'f32[16,128]{1,0:T(8,128)}', space=vmem, size = 0x2000, scoped, tag = 'scratch operand']
  %s0 = inlined_call_operand.hbm [shape: bf16[16,128], index: 0, kind: input, shape index: {}]
  %s1 = inlined_call_operand.hbm [shape: bf16[128,128], index: 1, kind: input, shape index: {}]
  %s2 = inlined_call_operand.vmem [shape: f32[1,128], index: 2, kind: input, shape index: {}]
  %s3 = inlined_call_operand.hbm [shape: f32[16,128], index: 3, kind: output, shape index: {}]
  %s4 = sld [smem:[#allocation0]]
  $region38: #{tpu_custom_call.1} parent=0
    _
  %s6 = ssub.s32 1, %s4
  %s7 = scalar_select 0, %s6, %s4
  $region1: #{tpu_custom_call.1} parent=0
    #allocation3 [shape = 'u8[4096]{0}', space=vmem, size = 0x1000, scoped, tag = 'input window, operand 0, single buffered']
    #allocation4 [shape = 's32[1]{0}', space=sflag, size = 0x4, scoped, tag = 'scoped memory for tpu_custom_call.1']
    #allocation5 [shape = 's32[1]{0}', space=sflag, size = 0x4, scoped, tag = 'scoped memory for tpu_custom_call.1']
    #allocation6 [shape = 'u8[32768]{0}', space=vmem, size = 0x8000, scoped, tag = 'input window, operand 1, single buffered']
    #allocation7 [shape = 's32[1]{0}', space=sflag, size = 0x4, scoped, tag = 'scoped memory for tpu_custom_call.1']
    #allocation8 [shape = 'u8[8192]{0}', space=vmem, size = 0x2000, scoped, tag = 'output window, operand 0, single buffered']
    %8 = vsyncpa [#allocation4], 0
    %9 = vsyncpa [#allocation7], 0
    %10 = vsyncpa [#allocation5], 0
    // Predicated region
    $region2: #{tpu_custom_call.1} parent=1 // pred_check
      _
    $region3: #{tpu_custom_call.1} parent=1 // pred_check_branch
      %12 = sbr.rel (0) target = $region5
    $region4: #{tpu_custom_call.1} parent=1 // pred_region
      %14 = vsyncadd [#allocation4], 0
      %s15 = sshll.u32 %s0, 4
      %s16 = int_to_ptr.hbm [resolvable:$true] %s15
      %s17 = sshll.u32 [#allocation3], 4
      %s18 = int_to_ptr.vmem [resolvable:$true] %s17
      %23 = dma.hbm_to_vmem [thread:$0]  %s16, 128, %s18, [#allocation4], 64, 64, 4
    $region5: #{tpu_custom_call.1} parent=1 // pred_fallthru
      _
    // Predicated region
    $region6: #{tpu_custom_call.1} parent=1 // pred_check
      _
    $region7: #{tpu_custom_call.1} parent=1 // pred_check_branch
      %25 = sbr.rel (0) target = $region9
    $region8: #{tpu_custom_call.1} parent=1 // pred_region
      %27 = vsyncadd [#allocation7], 0
      %s28 = sshll.u32 %s1, 4
      %s29 = int_to_ptr.hbm [resolvable:$true] %s28
      %s30 = sshll.u32 [#allocation6], 4
      %s31 = int_to_ptr.vmem [resolvable:$true] %s30
      %36 = dma.hbm_to_vmem [thread:$0]  %s29, 1024, %s31, [#allocation7], 64, 64, 4
    $region9: #{tpu_custom_call.1} parent=1 // pred_fallthru
      _
    // Predicated region
    $region10: #{tpu_custom_call.1} parent=1 // pred_check
      _
    $region11: #{tpu_custom_call.1} parent=1 // pred_check_branch
      %38 = sbr.rel (0) target = $region13
    $region12: #{tpu_custom_call.1} parent=1 // pred_region
      _
    $region13: #{tpu_custom_call.1} parent=1 // pred_fallthru
      _
    // Predicated region
    $region14: #{tpu_custom_call.1} parent=1 // pred_check
      _
    $region15: #{tpu_custom_call.1} parent=1 // pred_check_branch
      %40 = sbr.rel (0) target = $region17
    $region16: #{tpu_custom_call.1} parent=1 // pred_region
      %42 = dma.done [#allocation4], 128
    $region17: #{tpu_custom_call.1} parent=1 // pred_fallthru
      _
    // Predicated region
    $region18: #{tpu_custom_call.1} parent=1 // pred_check
      _
    $region19: #{tpu_custom_call.1} parent=1 // pred_check_branch
      %44 = sbr.rel (0) target = $region21
    $region20: #{tpu_custom_call.1} parent=1 // pred_region
      %46 = dma.done [#allocation7], 1024
    $region21: #{tpu_custom_call.1} parent=1 // pred_fallthru
      _
    %p47 = scmp.eq.s32.totalorder 0, 0
    // Predicated region
    $region22: #{tpu_custom_call.1} parent=1 // pred_check
      %p48 = pneg %p47
    $region23: #{tpu_custom_call.1} parent=1 // pred_check_branch
      %50 = sbr.rel (%p48) target = $region25
    $region24: #{tpu_custom_call.1} parent=1 // pred_region
      %v51 = vld [vmem:[%s2] sm:$0x1]
      %v53 = vperm.slane %v51, 0
      %55 = vst [vmem:[#allocation2] sm:$0xff] %v53
      %56 = vst [vmem:[#allocation2 + $0x8] sm:$0xff] %v53
    $region25: #{tpu_custom_call.1} parent=1 // pred_fallthru
      _
    %v57 = vld [vmem:[#allocation2] sm:$0xff]
    %v58 = vld [vmem:[#allocation2 + $0x8] sm:$0xff]
    %v59 = vld [vmem:[#allocation3] sm:$0xf]
    %v60 = vld [vmem:[#allocation3 + $0x4] sm:$0xf]
    %v61 = vld [vmem:[#allocation6] sm:$0xf]
    %v62 = vld [vmem:[#allocation6 + $0x4] sm:$0xf]
    %v63 = vld [vmem:[#allocation6 + $0x8] sm:$0xf]
    %v64 = vld [vmem:[#allocation6 + $0xc] sm:$0xf]
    %v65 = vld [vmem:[#allocation6 + $0x10] sm:$0xf]
    %v66 = vld [vmem:[#allocation6 + $0x14] sm:$0xf]
    %v67 = vld [vmem:[#allocation6 + $0x18] sm:$0xf]
    %v68 = vld [vmem:[#allocation6 + $0x1c] sm:$0xf]
    %v69 = vld [vmem:[#allocation6 + $0x20] sm:$0xf]
    %v70 = vld [vmem:[#allocation6 + $0x24] sm:$0xf]
    %v71 = vld [vmem:[#allocation6 + $0x28] sm:$0xf]
    %v72 = vld [vmem:[#allocation6 + $0x2c] sm:$0xf]
    %v73 = vld [vmem:[#allocation6 + $0x30] sm:$0xf]
    %v74 = vld [vmem:[#allocation6 + $0x34] sm:$0xf]
    %v75 = vld [vmem:[#allocation6 + $0x38] sm:$0xf]
    %v76 = vld [vmem:[#allocation6 + $0x3c] sm:$0xf]
    %v79 = vunpack.c.l.b16 %v59
    %v80 = vunpack.c.l.b16 %v60
    %v81 = vpack.c.b16 %v80, %v79
    %v99 = vunpack.c.l.b16 %v61
    %v100 = vunpack.c.l.b16 %v62
    %v101 = vunpack.c.l.b16 %v63
    %v102 = vunpack.c.l.b16 %v64
    %v103 = vunpack.c.l.b16 %v65
    %v104 = vunpack.c.l.b16 %v66
    %v105 = vunpack.c.l.b16 %v67
    %v106 = vunpack.c.l.b16 %v68
    %v107 = vunpack.c.l.b16 %v69
    %v108 = vunpack.c.l.b16 %v70
    %v109 = vunpack.c.l.b16 %v71
    %v110 = vunpack.c.l.b16 %v72
    %v111 = vunpack.c.l.b16 %v73
    %v112 = vunpack.c.l.b16 %v74
    %v113 = vunpack.c.l.b16 %v75
    %v114 = vunpack.c.l.b16 %v76
    %v115 = vpack.c.b16 %v100, %v99
    %v116 = vpack.c.b16 %v102, %v101
    %v117 = vpack.c.b16 %v104, %v103
    %v118 = vpack.c.b16 %v106, %v105
    %v119 = vpack.c.b16 %v108, %v107
    %v120 = vpack.c.b16 %v110, %v109
    %v121 = vpack.c.b16 %v112, %v111
    %v122 = vpack.c.b16 %v114, %v113
    %131 = vmatpush.bf16.msra.mxu0 %v122
    %132 = vmatpush.bf16.msra.mxu0 %v121
    %133 = vmatpush.bf16.msra.mxu0 %v120
    %134 = vmatpush.bf16.msra.mxu0 %v119
    %135 = vmatpush.bf16.msra.mxu0 %v118
    %136 = vmatpush.bf16.msra.mxu0 %v117
    %137 = vmatpush.bf16.msra.mxu0 %v116
    %138 = vmatpush.bf16.msra.mxu0 %v115
    %139 = vmatmul.bf16.gmra.mxu0 %v81
    %v140 = vpop.f32.mrf.mxu0
    %v141 = vadd.f32 0.0, %v140
    %v142 = vpop.f32.mrf.mxu0
    %v143 = vadd.f32 0.0, %v142
    %144 = vdwg.mxu0
    %v145 = vadd.f32 %v57, %v141
    %v146 = vadd.f32 %v58, %v143
    %147 = vst [vmem:[#allocation2] sm:$0xff] %v145
    %148 = vst [vmem:[#allocation2 + $0x8] sm:$0xff] %v146
    // Predicated region
    $region26: #{tpu_custom_call.1} parent=1 // pred_check
      %p149 = pneg %p47
    $region27: #{tpu_custom_call.1} parent=1 // pred_check_branch
      %151 = sbr.rel (%p149) target = $region29
    $region28: #{tpu_custom_call.1} parent=1 // pred_region
      %v152 = vld [vmem:[#allocation2] sm:$0xff]
      %v153 = vld [vmem:[#allocation2 + $0x8] sm:$0xff]
      %154 = vst [vmem:[#allocation8] sm:$0xff] %v152
      %155 = vst [vmem:[#allocation8 + $0x8] sm:$0xff] %v153
    $region29: #{tpu_custom_call.1} parent=1 // pred_fallthru
      _
    // Predicated region
    $region30: #{tpu_custom_call.1} parent=1 // pred_check
      _
    $region31: #{tpu_custom_call.1} parent=1 // pred_check_branch
      %157 = sbr.rel (0) target = $region33
    $region32: #{tpu_custom_call.1} parent=1 // pred_region
      %159 = vsyncadd [#allocation5], 0
      %s160 = sshll.u32 [#allocation8], 4
      %s161 = int_to_ptr.vmem [resolvable:$true] %s160
      %s162 = sshll.u32 %s3, 4
      %s163 = int_to_ptr.hbm [resolvable:$true] %s162
      %168 = dma.vmem_to_hbm [thread:$0]  %s161, 256, %s163, [#allocation5], 128, 128, 8
    $region33: #{tpu_custom_call.1} parent=1 // pred_fallthru
      _
    // Predicated region
    $region34: #{tpu_custom_call.1} parent=1 // pred_check
      _
    $region35: #{tpu_custom_call.1} parent=1 // pred_check_branch
      %170 = sbr.rel (0) target = $region37
    $region36: #{tpu_custom_call.1} parent=1 // pred_region
      %172 = dma.done [#allocation5], 256
    $region37: #{tpu_custom_call.1} parent=1 // pred_fallthru
      _
    %173 = vsyncpa [#allocation4], 1
    %174 = vsyncpa [#allocation7], 1
    %175 = vsyncpa [#allocation5], 1

</llo_original>
